<compile_context>
chip_gen: v5e
topology: v5e:2x2
jax: 0.10.0
libtpu: 0.0.40
codegen_flags: <defaults>
</compile_context>

<pallas_src>
import functools

import jax
import jax.numpy as jnp
from jax import lax
from jax.experimental import pallas as pl
from jax.experimental.pallas import tpu as pltpu


def _lane_roll(x, shift):
    """Circular roll along the last (lane) axis by a static shift.

    Uses the XLU rotate (pltpu.roll) when the lane dim is 128-aligned;
    otherwise falls back to a two-slice concat (tiny shapes only).
    """
    n = x.shape[-1]
    s = shift % n
    if s == 0:
        return x
    if n % 128 == 0:
        return pltpu.roll(x, shift=s, axis=x.ndim - 1)
    return jnp.concatenate([x[..., n - s:], x[..., :n - s]], axis=-1)


def _conv_relu_block(xt, w2d, bias, *, n_adj, dilation, bt):
    """relu(dilated circular conv1d + bias) for a whole batch tile at once.

    xt:   (Cin, N) f32, N = L*bt, lane index = i*bt + b (position-major,
          batch-minor).  Per-element circular shift == one global lane roll.
    w2d:  (Cout, K*Cin) f32, rows ordered [k major, cin minor]
    bias: (Cout, 1) f32
    returns (Cout, N) f32
    """
    K = 2 * n_adj + 1
    taps = [_lane_roll(xt, (n_adj - k) * dilation * bt) for k in range(K)]
    xcol = jnp.concatenate(taps, axis=0) if K > 1 else taps[0]      # (K*Cin, N)
    acc = jnp.dot(w2d, xcol, preferred_element_type=jnp.float32)    # (Cout, N)
    return jnp.maximum(acc + bias, 0.0)


def _stats_kernel(x_ref, w_ref, b_ref, stat_ref, *, n_adj, dilation, bt):
    # x: (1, Cin, N); stat out: (1, Cout, 2) = per-tile (sum, centered SSQ)
    y = _conv_relu_block(x_ref[0], w_ref[...], b_ref[...],
                         n_adj=n_adj, dilation=dilation, bt=bt)
    n = y.shape[1]
    s = jnp.sum(y, axis=1, keepdims=True)                      # (Cout, 1)
    m = s * (1.0 / n)
    q = jnp.sum((y - m) * (y - m), axis=1, keepdims=True)      # (Cout, 1)
    stat_ref[0] = jnp.concatenate([s, q], axis=1)              # (Cout, 2)


def _apply_kernel(x_ref, w_ref, b_ref, scale_ref, shift_ref, o_ref,
                  *, n_adj, dilation, bt):
    # x: (1, Cin, N); o: (1, Cout, N); scale/shift: (Cout, 1) folded BN affine
    y = _conv_relu_block(x_ref[0], w_ref[...], b_ref[...],
                         n_adj=n_adj, dilation=dilation, bt=bt)
    o_ref[0] = (y * scale_ref[...] + shift_ref[...]).astype(o_ref.dtype)


def _pick_batch_tile(B, Cin, Cout, L, K):
    # f32 bytes per lane of per-step working set:
    #   x tile (Cin) + K rolled taps / im2col (K*Cin) + acc & y (2*Cout) + out (Cout)
    bytes_per_lane = 4 * (Cin * (K + 1) + 3 * Cout)
    budget = 24 * 1024 * 1024          # per-step working set; fits v7x 64 MiB VMEM
    cap = max(1, min(B, budget // (bytes_per_lane * L)))
    divisors = [d for d in range(1, cap + 1) if B % d == 0]
    bt = divisors[-1]
    aligned = [d for d in divisors if (d * L) % 128 == 0]
    if aligned and aligned[-1] * 2 >= bt:
        bt = aligned[-1]               # prefer lane-dense (128-aligned) tiles
    # keep >= 2 grid steps so v7x's two TensorCores both get work,
    # but never shrink tiles below ~512 lanes per step.
    if bt == B and B % 2 == 0 and (bt // 2) * L >= 512:
        bt //= 2
    return bt


def snake_block(x, weight, bias, gamma, beta, *, n_adj=4, dilation=1, eps=1e-5):
    """x: (B, Cin, L); weight: (Cout, Cin, 2*n_adj+1); bias/gamma/beta: (Cout,)."""
    B, Cin, L = x.shape
    Cout, _, K = weight.shape
    assert K == 2 * n_adj + 1

    bt = _pick_batch_tile(B, Cin, Cout, L, K)
    nb = B // bt
    N = bt * L

    # Lane-dense layout plumbing (outside the kernel):
    #   x2[g, ci, i*bt + b] = x[g*bt + b, ci, i]
    x2 = (x.astype(jnp.float32)
            .reshape(nb, bt, Cin, L)
            .transpose(0, 2, 3, 1)
            .reshape(nb, Cin, N))

    # (Cout, Cin, K) -> (Cout, K*Cin), row order [k major, cin minor]
    w2d = jnp.transpose(weight, (0, 2, 1)).reshape(Cout, K * Cin).astype(jnp.float32)
    b2d = bias.reshape(Cout, 1).astype(jnp.float32)

    cparams = pltpu.CompilerParams(
        dimension_semantics=("parallel",),
        vmem_limit_bytes=48 * 1024 * 1024,   # working set sized to ~24 MiB/step
    )

    # ---- pass 1: per-tile (sum, centered SSQ) of relu(conv(x)+b) ----
    stats = pl.pallas_call(
        functools.partial(_stats_kernel, n_adj=n_adj, dilation=dilation, bt=bt),
        out_shape=jax.ShapeDtypeStruct((nb, Cout, 2), jnp.float32),
        grid=(nb,),
        in_specs=[
            pl.BlockSpec((1, Cin, N), lambda i: (i, 0, 0)),
            pl.BlockSpec((Cout, K * Cin), lambda i: (0, 0)),
            pl.BlockSpec((Cout, 1), lambda i: (0, 0)),
        ],
        out_specs=pl.BlockSpec((1, Cout, 2), lambda i: (i, 0, 0)),
        compiler_params=cparams,
    )(x2, w2d, b2d)

    # tiny, numerically-stable cross-tile combine (parallel-variance formula)
    cnt_tile = jnp.float32(N)
    cnt = jnp.float32(B * L)
    s_t = stats[:, :, 0]                                    # (nb, Cout)
    q_t = stats[:, :, 1]
    mean = jnp.sum(s_t, axis=0) / cnt                       # (Cout,)
    m_t = s_t / cnt_tile
    var = (jnp.sum(q_t, axis=0)
           + cnt_tile * jnp.sum((m_t - mean[None, :]) ** 2, axis=0)) / cnt
    inv = lax.rsqrt(var + eps)
    g32 = gamma.astype(jnp.float32)
    scale = (g32 * inv).reshape(Cout, 1)
    shift = (beta.astype(jnp.float32) - mean * g32 * inv).reshape(Cout, 1)

    # ---- pass 2: recompute conv+relu, apply folded BN affine, lane-dense store ----
    out2 = pl.pallas_call(
        functools.partial(_apply_kernel, n_adj=n_adj, dilation=dilation, bt=bt),
        out_shape=jax.ShapeDtypeStruct((nb, Cout, N), x.dtype),
        grid=(nb,),
        in_specs=[
            pl.BlockSpec((1, Cin, N), lambda i: (i, 0, 0)),
            pl.BlockSpec((Cout, K * Cin), lambda i: (0, 0)),
            pl.BlockSpec((Cout, 1), lambda i: (0, 0)),
            pl.BlockSpec((Cout, 1), lambda i: (0, 0)),
            pl.BlockSpec((Cout, 1), lambda i: (0, 0)),
        ],
        out_specs=pl.BlockSpec((1, Cout, N), lambda i: (i, 0, 0)),
        compiler_params=cparams,
    )(x2, w2d, b2d, scale, shift)

    # (nb, Cout, N) -> (B, Cout, L)
    out = (out2.reshape(nb, Cout, L, bt)
               .transpose(0, 3, 1, 2)
               .reshape(B, Cout, L))
    return out


def snake_block_ref(x, weight, bias, gamma, beta, *, n_adj=4, dilation=1):
    """Pure-JAX reference (lax.conv) for correctness check."""
    pad = n_adj * dilation
    xpad = jnp.concatenate([x[..., -pad:], x, x[..., :pad]], axis=2) if n_adj else x
    y = lax.conv_general_dilated(
        xpad, weight, window_strides=(1,), padding='VALID',
        rhs_dilation=(dilation,), dimension_numbers=('NCH', 'OIH', 'NCH'))
    y = y + bias[None, :, None]
    y = jnp.maximum(y, 0.0)
    mean = jnp.mean(y, axis=(0, 2), keepdims=True)
    var = jnp.mean((y - mean) ** 2, axis=(0, 2), keepdims=True)
    y = (y - mean) / jnp.sqrt(var + 1e-5)
    return y * gamma[None, :, None] + beta[None, :, None]


if __name__ == "__main__":
    # SnakeBlock(state_dim=4, out_state_dim=8, n_adj=4, dilation=1) at small shapes.
    B, state_dim, out_state_dim, L = 2, 4, 8, 16
    n_adj, dilation = 4, 1
    K = 2 * n_adj + 1

    key = jax.random.PRNGKey(0)
    kx, kw, kb, kg, kbeta = jax.random.split(key, 5)
    x = jax.random.normal(kx, (B, state_dim, L), dtype=jnp.float32)
    weight = 0.1 * jax.random.normal(kw, (out_state_dim, state_dim, K), dtype=jnp.float32)
    bias = 0.1 * jax.random.normal(kb, (out_state_dim,), dtype=jnp.float32)
    gamma = 1.0 + 0.1 * jax.random.normal(kg, (out_state_dim,), dtype=jnp.float32)
    beta = 0.1 * jax.random.normal(kbeta, (out_state_dim,), dtype=jnp.float32)

    out = snake_block(x, weight, bias, gamma, beta, n_adj=n_adj, dilation=dilation)
    out = jax.block_until_ready(out)

    ref = snake_block_ref(x, weight, bias, gamma, beta, n_adj=n_adj, dilation=dilation)
    if not jnp.allclose(out, ref, rtol=1e-4, atol=1e-4):
        raise AssertionError("Pallas SnakeBlock does not match reference")

    print("KERNEL_OK")
</pallas_src>

<mosaic_0001>
module attributes {stable_mosaic.version = 11 : i64} {
  func.func @_stats_kernel(%arg0: i32, %arg1: memref<1x4x32xf32, #tpu.memory_space<vmem>>, %arg2: memref<8x36xf32, #tpu.memory_space<vmem>>, %arg3: memref<8x1xf32, #tpu.memory_space<vmem>>, %arg4: memref<1x8x2xf32, #tpu.memory_space<vmem>>) attributes {dimension_semantics = [#tpu.dimension_semantics<parallel>], iteration_bounds = array<i64: 1>, scalar_prefetch = 0 : i64, scratch_operands = 0 : i64, tpu.core_type = #tpu.core_type<tc>, window_params = [{transform_indices = @transform_0, window_bounds = array<i64: 1, 4, 32>}, {pipeline_mode = #tpu.pipeline_mode<synchronous>, transform_indices = @transform_1, window_bounds = array<i64: 8, 36>}, {pipeline_mode = #tpu.pipeline_mode<synchronous>, transform_indices = @transform_2, window_bounds = array<i64: 8, 1>}, {transform_indices = @transform_3, window_bounds = array<i64: 1, 8, 2>}]} {
    %c0 = arith.constant 0 : index
    %c0_0 = arith.constant 0 : index
    %c0_1 = arith.constant 0 : index
    %0 = vector.load %arg1[%c0, %c0_0, %c0_1] : memref<1x4x32xf32, #tpu.memory_space<vmem>>, vector<1x4x32xf32>
    %1 = vector.shape_cast %0 : vector<1x4x32xf32> to vector<4x32xf32>
    %c0_2 = arith.constant 0 : index
    %c0_3 = arith.constant 0 : index
    %2 = vector.load %arg2[%c0_2, %c0_3] : memref<8x36xf32, #tpu.memory_space<vmem>>, vector<8x36xf32>
    %c0_4 = arith.constant 0 : index
    %c0_5 = arith.constant 0 : index
    %3 = vector.load %arg3[%c0_4, %c0_5] : memref<8x1xf32, #tpu.memory_space<vmem>>, vector<8x1xf32>
    %4 = vector.extract_strided_slice %1 {offsets = [0, 24], sizes = [4, 8], strides = [1, 1]} : vector<4x32xf32> to vector<4x8xf32>
    %5 = vector.extract_strided_slice %1 {offsets = [0, 0], sizes = [4, 24], strides = [1, 1]} : vector<4x32xf32> to vector<4x24xf32>
    %6 = tpu.concatenate %4, %5 in 1 : vector<4x8xf32>, vector<4x24xf32> -> vector<4x32xf32>
    %7 = vector.extract_strided_slice %1 {offsets = [0, 26], sizes = [4, 6], strides = [1, 1]} : vector<4x32xf32> to vector<4x6xf32>
    %8 = vector.extract_strided_slice %1 {offsets = [0, 0], sizes = [4, 26], strides = [1, 1]} : vector<4x32xf32> to vector<4x26xf32>
    %9 = tpu.concatenate %7, %8 in 1 : vector<4x6xf32>, vector<4x26xf32> -> vector<4x32xf32>
    %10 = vector.extract_strided_slice %1 {offsets = [0, 28], sizes = [4, 4], strides = [1, 1]} : vector<4x32xf32> to vector<4x4xf32>
    %11 = vector.extract_strided_slice %1 {offsets = [0, 0], sizes = [4, 28], strides = [1, 1]} : vector<4x32xf32> to vector<4x28xf32>
    %12 = tpu.concatenate %10, %11 in 1 : vector<4x4xf32>, vector<4x28xf32> -> vector<4x32xf32>
    %13 = vector.extract_strided_slice %1 {offsets = [0, 30], sizes = [4, 2], strides = [1, 1]} : vector<4x32xf32> to vector<4x2xf32>
    %14 = vector.extract_strided_slice %1 {offsets = [0, 0], sizes = [4, 30], strides = [1, 1]} : vector<4x32xf32> to vector<4x30xf32>
    %15 = tpu.concatenate %13, %14 in 1 : vector<4x2xf32>, vector<4x30xf32> -> vector<4x32xf32>
    %16 = vector.extract_strided_slice %1 {offsets = [0, 2], sizes = [4, 30], strides = [1, 1]} : vector<4x32xf32> to vector<4x30xf32>
    %17 = vector.extract_strided_slice %1 {offsets = [0, 0], sizes = [4, 2], strides = [1, 1]} : vector<4x32xf32> to vector<4x2xf32>
    %18 = tpu.concatenate %16, %17 in 1 : vector<4x30xf32>, vector<4x2xf32> -> vector<4x32xf32>
    %19 = vector.extract_strided_slice %1 {offsets = [0, 4], sizes = [4, 28], strides = [1, 1]} : vector<4x32xf32> to vector<4x28xf32>
    %20 = vector.extract_strided_slice %1 {offsets = [0, 0], sizes = [4, 4], strides = [1, 1]} : vector<4x32xf32> to vector<4x4xf32>
    %21 = tpu.concatenate %19, %20 in 1 : vector<4x28xf32>, vector<4x4xf32> -> vector<4x32xf32>
    %22 = vector.extract_strided_slice %1 {offsets = [0, 6], sizes = [4, 26], strides = [1, 1]} : vector<4x32xf32> to vector<4x26xf32>
    %23 = vector.extract_strided_slice %1 {offsets = [0, 0], sizes = [4, 6], strides = [1, 1]} : vector<4x32xf32> to vector<4x6xf32>
    %24 = tpu.concatenate %22, %23 in 1 : vector<4x26xf32>, vector<4x6xf32> -> vector<4x32xf32>
    %25 = vector.extract_strided_slice %1 {offsets = [0, 8], sizes = [4, 24], strides = [1, 1]} : vector<4x32xf32> to vector<4x24xf32>
    %26 = vector.extract_strided_slice %1 {offsets = [0, 0], sizes = [4, 8], strides = [1, 1]} : vector<4x32xf32> to vector<4x8xf32>
    %27 = tpu.concatenate %25, %26 in 1 : vector<4x24xf32>, vector<4x8xf32> -> vector<4x32xf32>
    %28 = tpu.concatenate %6, %9, %12, %15, %1, %18, %21, %24, %27 in 0 : vector<4x32xf32>, vector<4x32xf32>, vector<4x32xf32>, vector<4x32xf32>, vector<4x32xf32>, vector<4x32xf32>, vector<4x32xf32>, vector<4x32xf32>, vector<4x32xf32> -> vector<36x32xf32>
    %cst = arith.constant dense<0.000000e+00> : vector<8x32xf32>
    %29 = tpu.matmul %2, %28, %cst {dimension_numbers = #tpu.dot_dimension_numbers<[1], [0], [0], [1], [0, 0, 1, 1], [], []>} : vector<8x36xf32>, vector<36x32xf32>, vector<8x32xf32> -> vector<8x32xf32>
    %30 = vector.broadcast %3 : vector<8x1xf32> to vector<8x32xf32>
    %31 = arith.addf %29, %30 : vector<8x32xf32>
    %cst_6 = arith.constant 0.000000e+00 : f32
    %32 = vector.broadcast %cst_6 : f32 to vector<8x32xf32>
    %33 = arith.maximumf %31, %32 : vector<8x32xf32>
    %cst_7 = arith.constant dense<0.000000e+00> : vector<8xf32>
    %34 = vector.multi_reduction <add>, %33, %cst_7 [1] : vector<8x32xf32> to vector<8xf32>
    %35 = vector.shape_cast %34 : vector<8xf32> to vector<8x1xf32>
    %cst_8 = arith.constant 3.125000e-02 : f32
    %36 = vector.broadcast %cst_8 : f32 to vector<8x1xf32>
    %37 = arith.mulf %35, %36 : vector<8x1xf32>
    %38 = vector.broadcast %37 : vector<8x1xf32> to vector<8x32xf32>
    %39 = arith.subf %33, %38 : vector<8x32xf32>
    %40 = vector.broadcast %37 : vector<8x1xf32> to vector<8x32xf32>
    %41 = arith.subf %33, %40 : vector<8x32xf32>
    %42 = arith.mulf %39, %41 : vector<8x32xf32>
    %cst_9 = arith.constant dense<0.000000e+00> : vector<8xf32>
    %43 = vector.multi_reduction <add>, %42, %cst_9 [1] : vector<8x32xf32> to vector<8xf32>
    %44 = vector.shape_cast %43 : vector<8xf32> to vector<8x1xf32>
    %45 = tpu.concatenate %35, %44 in 1 : vector<8x1xf32>, vector<8x1xf32> -> vector<8x2xf32>
    %c0_10 = arith.constant 0 : index
    %c0_11 = arith.constant 0 : index
    %c0_12 = arith.constant 0 : index
    %46 = vector.load %arg4[%c0_10, %c0_11, %c0_12] : memref<1x8x2xf32, #tpu.memory_space<vmem>>, vector<1x8x2xf32>
    %47 = vector.shape_cast %46 : vector<1x8x2xf32> to vector<8x2xf32>
    %48 = vector.shape_cast %45 : vector<8x2xf32> to vector<1x8x2xf32>
    tpu.vector_store %arg4[%c0_10, %c0_11, %c0_12], %48 {strides = array<i32>} : memref<1x8x2xf32, #tpu.memory_space<vmem>>, vector<1x8x2xf32>,
    return
  }
  func.func @transform_0(%arg0: i32) -> (i32, i32, i32) {
    %c0_i32 = arith.constant 0 : i32
    %c0_i32_0 = arith.constant 0 : i32
    %c0_i32_1 = arith.constant 0 : i32
    return %arg0, %c0_i32, %c0_i32_0 : i32, i32, i32
  }
  func.func @transform_1(%arg0: i32) -> (i32, i32) {
    %c0_i32 = arith.constant 0 : i32
    %c0_i32_0 = arith.constant 0 : i32
    %c0_i32_1 = arith.constant 0 : i32
    return %c0_i32, %c0_i32_0 : i32, i32
  }
  func.func @transform_2(%arg0: i32) -> (i32, i32) {
    %c0_i32 = arith.constant 0 : i32
    %c0_i32_0 = arith.constant 0 : i32
    %c0_i32_1 = arith.constant 0 : i32
    return %c0_i32, %c0_i32_0 : i32, i32
  }
  func.func @transform_3(%arg0: i32) -> (i32, i32, i32) {
    %c0_i32 = arith.constant 0 : i32
    %c0_i32_0 = arith.constant 0 : i32
    %c0_i32_1 = arith.constant 0 : i32
    return %arg0, %c0_i32, %c0_i32_0 : i32, i32, i32
  }
}

</mosaic_0001>

<llo_original>
// kernel: tpu_custom_call.1
$region0: #{tpu_custom_call.1}
  #allocation0 [shape = 'u32[]', space=smem, size = 0x4, offset = 0x4, fixed_abs, tag = 'smem constant byte address 0x4 - core index']
  #allocation1 [shape = 'u32[72,128]{1,0:T(1,128)}', space=vmem, size = 0x9000, scoped, tag = 'internal scratch']
  %s0 = inlined_call_operand.hbm [shape: f32[1,4,32], index: 0, kind: input, shape index: {}]
  %s1 = inlined_call_operand.vmem [shape: f32[8,36], index: 1, kind: input, shape index: {}]
  %s2 = inlined_call_operand.vmem [shape: f32[8,1], index: 2, kind: input, shape index: {}]
  %s3 = inlined_call_operand.vmem [shape: f32[1,8,2], index: 3, kind: output, shape index: {}]
  %s4 = sld [smem:[#allocation0]]
  $region26: #{tpu_custom_call.1} parent=0
    _
  %s6 = ssub.s32 1, %s4
  %s7 = scalar_select 0, %s6, %s4
  $region1: #{tpu_custom_call.1} parent=0
    #allocation2 [shape = 'u8[2048]{0}', space=vmem, size = 0x800, scoped, tag = 'input window, operand 0, single buffered']
    #allocation3 [shape = 's32[1]{0}', space=sflag, size = 0x4, scoped, tag = 'scoped memory for tpu_custom_call.1']
    %8 = vsyncpa [#allocation3], 0
    // Predicated region
    $region2: #{tpu_custom_call.1} parent=1 // pred_check
      _
    $region3: #{tpu_custom_call.1} parent=1 // pred_check_branch
      %10 = sbr.rel (0) target = $region5
    $region4: #{tpu_custom_call.1} parent=1 // pred_region
      %12 = vsyncadd [#allocation3], 0
      %s14 = sshll.u32 %s0, 4
      %s15 = int_to_ptr.hbm [resolvable:$true] %s14
      %s16 = sshll.u32 [#allocation2], 4
      %s17 = int_to_ptr.vmem [resolvable:$true] %s16
      %19 = dma.hbm_to_vmem [thread:$0]  %s15, 64, %s17, [#allocation3]
    $region5: #{tpu_custom_call.1} parent=1 // pred_fallthru
      _
    // Predicated region
    $region6: #{tpu_custom_call.1} parent=1 // pred_check
      _
    $region7: #{tpu_custom_call.1} parent=1 // pred_check_branch
      %21 = sbr.rel (0) target = $region9
    $region8: #{tpu_custom_call.1} parent=1 // pred_region
      _
    $region9: #{tpu_custom_call.1} parent=1 // pred_fallthru
      _
    // Predicated region
    $region10: #{tpu_custom_call.1} parent=1 // pred_check
      _
    $region11: #{tpu_custom_call.1} parent=1 // pred_check_branch
      %23 = sbr.rel (0) target = $region13
    $region12: #{tpu_custom_call.1} parent=1 // pred_region
      _
    $region13: #{tpu_custom_call.1} parent=1 // pred_fallthru
      _
    // Predicated region
    $region14: #{tpu_custom_call.1} parent=1 // pred_check
      _
    $region15: #{tpu_custom_call.1} parent=1 // pred_check_branch
      %25 = sbr.rel (0) target = $region17
    $region16: #{tpu_custom_call.1} parent=1 // pred_region
      %27 = dma.done [#allocation3], 64
    $region17: #{tpu_custom_call.1} parent=1 // pred_fallthru
      _
    %v28 = vld [vmem:[#allocation2] sm:$0xf]
    %v29 = vld [vmem:[%s1] sm:$0xff]
    %v30 = vld [vmem:[%s2] sm:$0xff]
    %32 = vrot.lane.b32.xlu0 %v28, 104
    %v33 = vpop.permute.xlu0 %32
    %35 = vrot.lane.b32.xlu0 %v28, 8
    %v36 = vpop.permute.xlu0 %35
    %vm38 = vcmask 64512
    %v39 = vsel %vm38, %v33, %v36
    %40 = vrot.lane.b32.xlu0 %v28, 102
    %v41 = vpop.permute.xlu0 %40
    %43 = vrot.lane.b32.xlu0 %v28, 6
    %v44 = vpop.permute.xlu0 %43
    %vm46 = vcmask 48128
    %v47 = vsel %vm46, %v41, %v44
    %48 = vrot.lane.b32.xlu0 %v28, 100
    %v49 = vpop.permute.xlu0 %48
    %51 = vrot.lane.b32.xlu0 %v28, 4
    %v52 = vpop.permute.xlu0 %51
    %vm54 = vcmask 31744
    %v55 = vsel %vm54, %v49, %v52
    %56 = vrot.lane.b32.xlu0 %v28, 98
    %v57 = vpop.permute.xlu0 %56
    %59 = vrot.lane.b32.xlu0 %v28, 2
    %v60 = vpop.permute.xlu0 %59
    %vm62 = vcmask 15360
    %v63 = vsel %vm62, %v57, %v60
    %64 = vrot.lane.b32.xlu0 %v28, 126
    %v65 = vpop.permute.xlu0 %64
    %67 = vrot.lane.b32.xlu0 %v28, 30
    %v68 = vpop.permute.xlu0 %67
    %vm70 = vcmask 244736
    %v71 = vsel %vm70, %v65, %v68
    %72 = vrot.lane.b32.xlu0 %v28, 124
    %v73 = vpop.permute.xlu0 %72
    %75 = vrot.lane.b32.xlu0 %v28, 28
    %v76 = vpop.permute.xlu0 %75
    %vm78 = vcmask 228352
    %v79 = vsel %vm78, %v73, %v76
    %80 = vrot.lane.b32.xlu0 %v28, 122
    %v81 = vpop.permute.xlu0 %80
    %83 = vrot.lane.b32.xlu0 %v28, 26
    %v84 = vpop.permute.xlu0 %83
    %vm86 = vcmask 211968
    %v87 = vsel %vm86, %v81, %v84
    %88 = vrot.lane.b32.xlu0 %v28, 120
    %v89 = vpop.permute.xlu0 %88
    %91 = vrot.lane.b32.xlu0 %v28, 24
    %v92 = vpop.permute.xlu0 %91
    %vm94 = vcmask 195584
    %v95 = vsel %vm94, %v89, %v92
    %v97 = vrot.slane %v47, 4
    %v100 = vrot.slane %v63, 4
    %v103 = vrot.slane %v71, 4
    %v106 = vrot.slane %v87, 4
    %vm108 = vcmask 1043456
    %v109 = vsel %vm108, %v39, %v97
    %v110 = vsel %vm108, %v55, %v100
    %v111 = vsel %vm108, %v28, %v103
    %v112 = vsel %vm108, %v79, %v106
    %114 = vset.pattern.permute.xlu0 0
    %115 = vperm.xlu0 %114, %v30
    %v116 = vpop.permute.xlu0 %115
    %vm118 = vcmask 293888
    %v120 = vsel %vm118, %v29, 0
    %v123 = vsel %vm108, %v95, 0
    %125 = vmatpush.msra.mxu0 0.0
    %126 = vmatpush.msra.mxu0 0.0
    %127 = vmatpush.msra.mxu0 0.0
    %128 = vmatpush.msra.mxu0 0.0
    %129 = vmatpush.msra.mxu0 0.0
    %130 = vmatpush.msra.mxu0 0.0
    %131 = vmatpush.msra.mxu0 0.0
    %132 = vmatpush.msra.mxu0 0.0
    %133 = vmatpush.msra.mxu0 0.0
    %134 = vmatpush.msra.mxu0 0.0
    %135 = vmatpush.msra.mxu0 0.0
    %136 = vmatpush.msra.mxu0 %v123
    %137 = vmatpush.msra.mxu0 %v112
    %138 = vmatpush.msra.mxu0 %v111
    %139 = vmatpush.msra.mxu0 %v110
    %140 = vmatpush.msra.mxu0 %v109
    %141 = vmatmul.f32.gmra.mxu0 %v120
    %v142 = vpop.f32.mrf.mxu0
    %v143 = vadd.f32 %v116, %v142
    %144 = vdwg.mxu0
    %v145 = vmax.f32 %v143, 0.0
    %vm146 = vcmask 261120
    %v147 = vsel %vm146, %v145, 0.0
    %148 = vadd.xlane.f32.xlu0 %v147
    %v149 = vpop.xlane.xlu0 %148
    %v150 = vmul.f32 %v149, 0.03125
    %v151 = vsub.f32 %v145, %v150
    %v152 = vmul.f32 %v151, %v151
    %v153 = vsel %vm146, %v152, 0.0
    %154 = vadd.xlane.f32.xlu0 %v153
    %v155 = vpop.xlane.xlu0 %154
    %vm156 = vcmask 7168
    %v157 = vsel %vm156, %v149, %v155
    %158 = vst.msk [vmem:[%s3] sm:$0xff] %vm62, %v157
    // Predicated region
    $region18: #{tpu_custom_call.1} parent=1 // pred_check
      _
    $region19: #{tpu_custom_call.1} parent=1 // pred_check_branch
      %160 = sbr.rel (0) target = $region21
    $region20: #{tpu_custom_call.1} parent=1 // pred_region
      _
    $region21: #{tpu_custom_call.1} parent=1 // pred_fallthru
      _
    // Predicated region
    $region22: #{tpu_custom_call.1} parent=1 // pred_check
      _
    $region23: #{tpu_custom_call.1} parent=1 // pred_check_branch
      %162 = sbr.rel (0) target = $region25
    $region24: #{tpu_custom_call.1} parent=1 // pred_region
      _
    $region25: #{tpu_custom_call.1} parent=1 // pred_fallthru
      _
    %163 = vsyncpa [#allocation3], 1

</llo_original>
